<compile_context>
chip_gen: v7x
topology: tpu7x:2x2x1
jax: 0.10.0
libtpu: 0.0.40
codegen_flags: <defaults>
</compile_context>

<pallas_src>
import jax
import jax.numpy as jnp
from jax.experimental import pallas as pl
from jax.experimental.pallas import tpu as pltpu


LANES = 128
NEG_BIG = -1e30  # padded-action-lane bias; kept in f32 so exp() underflows to exactly 0


def _round_up(n, m):
    return ((n + m - 1) // m) * m


# ---------------------------------------------------------------------------
# Kernels
# ---------------------------------------------------------------------------
def _logits_f32(x_ref, w1_ref, b1_ref, w2_ref, b2_ref):
    """Shared fc1+relu+fc2 body: bf16 MXU operands, f32 accumulate/bias."""
    x = x_ref[...].astype(w1_ref.dtype)  # in-kernel f32 -> bf16 cast (VPU, co-issues)
    h = jnp.dot(x, w1_ref[...], preferred_element_type=jnp.float32) + b1_ref[...]
    h = jnp.maximum(h, 0.0)
    logits = (
        jnp.dot(h.astype(w2_ref.dtype), w2_ref[...], preferred_element_type=jnp.float32)
        + b2_ref[...]
    )
    return logits


def policy_forward_kernel(x_ref, w1_ref, b1_ref, w2_ref, b2_ref, out_ref):
    logits = _logits_f32(x_ref, w1_ref, b1_ref, w2_ref, b2_ref)
    m = jnp.max(logits, axis=-1, keepdims=True)
    e = jnp.exp(logits - m)
    denom = jnp.sum(e, axis=-1, keepdims=True)
    # Exact divide so rows sum to 1 to f32 precision (approx reciprocal biased
    # log(probs) in the downstream policy-gradient update).
    out_ref[...] = (e / denom).astype(out_ref.dtype)


def policy_act_kernel(x_ref, w1_ref, b1_ref, w2_ref, b2_ref, act_ref, logp_ref):
    """Fused act(): greedy action and its log-probability, no prob slab writeback."""
    logits = _logits_f32(x_ref, w1_ref, b1_ref, w2_ref, b2_ref)
    m = jnp.max(logits, axis=-1, keepdims=True)                 # (tb, 1)
    e = jnp.exp(logits - m)
    denom = jnp.sum(e, axis=-1, keepdims=True)                  # (tb, 1)
    # First index attaining the max (matches torch.argmax tie-breaking).
    col = jax.lax.broadcasted_iota(jnp.int32, logits.shape, 1)
    cand = jnp.where(logits == m, col, logits.shape[-1])
    act_ref[...] = jnp.min(cand, axis=-1, keepdims=True).astype(jnp.int32)
    # log_softmax at the argmax: logits[argmax] - (m + log(denom)) == -log(denom).
    logp_ref[...] = -jnp.log(denom)


# ---------------------------------------------------------------------------
# Parameter init / one-time preparation
# ---------------------------------------------------------------------------
def init_policy_params(key, s_size, a_size, h_size):
    """Matches nn.init: weights ~ N(0, 0.5), biases = 0 (PyTorch weight is (out, in))."""
    k1, k2 = jax.random.split(key)
    w1 = jax.random.normal(k1, (h_size, s_size), dtype=jnp.float32) * 0.5
    b1 = jnp.zeros((1, h_size), dtype=jnp.float32)
    w2 = jax.random.normal(k2, (a_size, h_size), dtype=jnp.float32) * 0.5
    b2 = jnp.zeros((1, a_size), dtype=jnp.float32)
    return w1, b1, w2, b2


def prepare_params(w1, b1, w2, b2):
    """One-time pad/cast so the per-call wrapper does no weight-side work.

    Returns kernel-ready params:
      w1_t: (S, H)      bf16
      b1  : (1, H)      f32
      w2_t: (H, A_pad)  bf16, action dim zero-padded to a 128-lane multiple
      b2  : (1, A_pad)  f32, padded lanes = -1e30 (exp() == 0 in the softmax)
    """
    a_size = int(w2.shape[0])
    a_pad = _round_up(max(a_size, LANES), LANES)
    w1_t = jnp.asarray(w1.T, dtype=jnp.bfloat16)
    w2_t = jnp.pad(jnp.asarray(w2.T, jnp.float32), ((0, 0), (0, a_pad - a_size)))
    w2_t = w2_t.astype(jnp.bfloat16)
    b2_p = jnp.pad(
        jnp.asarray(b2, jnp.float32), ((0, 0), (0, a_pad - a_size)),
        constant_values=NEG_BIG,
    )
    return {
        "w1_t": w1_t,
        "b1": jnp.asarray(b1, jnp.float32),
        "w2_t": w2_t,
        "b2": b2_p,
        "a_size": a_size,
    }


# ---------------------------------------------------------------------------
# Wrappers
# ---------------------------------------------------------------------------
def _grid_setup(B, tb, num_tiles):
    if tb is None:
        # ~num_tiles grid steps: >=2 keeps both v7x TensorCores busy; on
        # single-TC v5e/v6e the one extra step costs ~0.35us (negligible).
        tb = pl.cdiv(B, num_tiles)
    # Multiple of 16 sublanes (bf16 packing / clean MXU pushes), capped by B.
    tb = _round_up(min(max(tb, 16), _round_up(B, 16)), 16)
    B_pad = _round_up(B, tb)
    return tb, B_pad


def _in_specs(tb, S, H, A_pad):
    return [
        # Batch tile of states, swept by the grid.
        pl.BlockSpec((tb, S), lambda i: (i, 0)),
        # Weights / biases: constant index_map -> DMA'd once, VMEM-resident.
        pl.BlockSpec((S, H), lambda i: (0, 0)),
        pl.BlockSpec((1, H), lambda i: (0, 0)),
        pl.BlockSpec((H, A_pad), lambda i: (0, 0)),
        pl.BlockSpec((1, A_pad), lambda i: (0, 0)),
    ]


def _io_bytes(B_pad, S, H, A_pad, out_bytes):
    return (B_pad * S * 4            # x (f32)
            + S * H * 2 + H * A_pad * 2   # bf16 weights
            + (H + A_pad) * 4        # f32 biases
            + out_bytes)


def policy_forward(x, params, *, tb=None, num_tiles=2):
    """probs = softmax(relu(x @ W1^T + b1) @ W2^T + b2, axis=1) -> (B, A) f32."""
    B, S = x.shape
    w1_t, b1, w2_t, b2 = params["w1_t"], params["b1"], params["w2_t"], params["b2"]
    H, A_pad = w2_t.shape
    A = params["a_size"]

    tb, B_pad = _grid_setup(B, tb, num_tiles)
    if B_pad != B:
        x = jnp.pad(x, ((0, B_pad - B), (0, 0)))
    grid = (B_pad // tb,)

    cost = pl.CostEstimate(
        flops=2 * B_pad * (S * H + H * A_pad),
        transcendentals=B_pad * A_pad,
        bytes_accessed=_io_bytes(B_pad, S, H, A_pad, B_pad * A_pad * 4),
    )

    out = pl.pallas_call(
        policy_forward_kernel,
        out_shape=jax.ShapeDtypeStruct((B_pad, A_pad), jnp.float32),
        grid=grid,
        in_specs=_in_specs(tb, S, H, A_pad),
        out_specs=pl.BlockSpec((tb, A_pad), lambda i: (i, 0)),
        compiler_params=pltpu.CompilerParams(dimension_semantics=("parallel",)),
        cost_estimate=cost,
    )(x, w1_t, b1, w2_t, b2)

    return out[:B, :A]


def policy_act(x, params, *, tb=None, num_tiles=2):
    """Fused act(): greedy action ids (B,) int32 and their log-probs (B,) f32."""
    B, S = x.shape
    w1_t, b1, w2_t, b2 = params["w1_t"], params["b1"], params["w2_t"], params["b2"]
    H, A_pad = w2_t.shape

    tb, B_pad = _grid_setup(B, tb, num_tiles)
    if B_pad != B:
        x = jnp.pad(x, ((0, B_pad - B), (0, 0)))
    grid = (B_pad // tb,)

    cost = pl.CostEstimate(
        flops=2 * B_pad * (S * H + H * A_pad),
        transcendentals=B_pad * A_pad,
        bytes_accessed=_io_bytes(B_pad, S, H, A_pad, B_pad * 8),
    )

    acts, logps = pl.pallas_call(
        policy_act_kernel,
        out_shape=(
            jax.ShapeDtypeStruct((B_pad, 1), jnp.int32),
            jax.ShapeDtypeStruct((B_pad, 1), jnp.float32),
        ),
        grid=grid,
        in_specs=_in_specs(tb, S, H, A_pad),
        out_specs=(
            pl.BlockSpec((tb, 1), lambda i: (i, 0)),
            pl.BlockSpec((tb, 1), lambda i: (i, 0)),
        ),
        compiler_params=pltpu.CompilerParams(dimension_semantics=("parallel",)),
        cost_estimate=cost,
    )(x, w1_t, b1, w2_t, b2)

    return acts[:B, 0], logps[:B, 0]


# ---------------------------------------------------------------------------
if __name__ == "__main__":
    # CartPole-style policy net; batch of states so the grid actually iterates.
    batch, s_size, a_size, h_size = 256, 8, 4, 32

    key = jax.random.PRNGKey(0)
    k_params, k_x = jax.random.split(key)
    w1, b1, w2, b2 = init_policy_params(k_params, s_size, a_size, h_size)
    params = prepare_params(w1, b1, w2, b2)  # one-time pad/cast, not per call
    x = jax.random.normal(k_x, (batch, s_size), dtype=jnp.float32)

    probs = policy_forward(x, params)                 # forward(): (B, A) probs
    actions, logps = policy_act(x, params)            # fused act(): ids + log-probs
    probs, actions, logps = jax.block_until_ready((probs, actions, logps))

    assert probs.shape == (batch, a_size)
    assert actions.shape == (batch,) and actions.dtype == jnp.int32
    assert logps.shape == (batch,)

    # Pure-JAX f32 reference of the PyTorch forward.
    h_ref = jnp.maximum(x @ w1.T + b1, 0.0)
    logits_ref = h_ref @ w2.T + b2
    probs_ref = jax.nn.softmax(logits_ref, axis=1)

    # Forward checks: rows sum to 1 (exact divide), probs match f32 reference
    # within bf16-weight tolerance.
    assert jnp.allclose(jnp.sum(probs, axis=1), 1.0, atol=1e-3)
    assert jnp.allclose(probs, probs_ref, atol=5e-2, rtol=5e-2)

    # act() checks: valid action range, action is the argmax of the kernel's own
    # probs, log-prob equals log of the chosen prob, and matches the f32
    # reference log-softmax at that action.
    assert bool(jnp.all((actions >= 0) & (actions < a_size)))
    chosen_p = probs[jnp.arange(batch), actions]
    assert jnp.allclose(chosen_p, jnp.max(probs, axis=1), atol=1e-5)
    assert jnp.allclose(logps, jnp.log(chosen_p), atol=1e-4)
    logp_ref = logits_ref[jnp.arange(batch), actions] - jax.scipy.special.logsumexp(
        logits_ref, axis=1
    )
    assert jnp.allclose(logps, logp_ref, atol=1e-1)

    print("KERNEL_OK")
</pallas_src>

<mosaic_0001>
module attributes {stable_mosaic.version = 11 : i64} {
  func.func @policy_forward_kernel(%arg0: i32, %arg1: memref<128x8xf32, #tpu.memory_space<vmem>>, %arg2: memref<8x32xbf16, #tpu.memory_space<vmem>>, %arg3: memref<1x32xf32, #tpu.memory_space<vmem>>, %arg4: memref<32x128xbf16, #tpu.memory_space<vmem>>, %arg5: memref<1x128xf32, #tpu.memory_space<vmem>>, %arg6: memref<128x128xf32, #tpu.memory_space<vmem>>) attributes {dimension_semantics = [#tpu.dimension_semantics<parallel>], iteration_bounds = array<i64: 2>, scalar_prefetch = 0 : i64, scratch_operands = 0 : i64, tpu.core_type = #tpu.core_type<tc>, window_params = [{transform_indices = @transform_0, window_bounds = array<i64: 128, 8>}, {pipeline_mode = #tpu.pipeline_mode<synchronous>, transform_indices = @transform_1, window_bounds = array<i64: 8, 32>}, {pipeline_mode = #tpu.pipeline_mode<synchronous>, transform_indices = @transform_2, window_bounds = array<i64: 1, 32>}, {pipeline_mode = #tpu.pipeline_mode<synchronous>, transform_indices = @transform_3, window_bounds = array<i64: 32, 128>}, {pipeline_mode = #tpu.pipeline_mode<synchronous>, transform_indices = @transform_4, window_bounds = array<i64: 1, 128>}, {transform_indices = @transform_5, window_bounds = array<i64: 128, 128>}]} {
    %c0 = arith.constant 0 : index
    %c0_0 = arith.constant 0 : index
    %0 = vector.load %arg1[%c0, %c0_0] : memref<128x8xf32, #tpu.memory_space<vmem>>, vector<128x8xf32>
    %1 = arith.truncf %0 : vector<128x8xf32> to vector<128x8xbf16>
    %c0_1 = arith.constant 0 : index
    %c0_2 = arith.constant 0 : index
    %2 = vector.load %arg2[%c0_1, %c0_2] : memref<8x32xbf16, #tpu.memory_space<vmem>>, vector<8x32xbf16>
    %cst = arith.constant dense<0.000000e+00> : vector<128x32xf32>
    %3 = tpu.matmul %1, %2, %cst {dimension_numbers = #tpu.dot_dimension_numbers<[1], [0], [0], [1], [0, 0, 1, 1], [], []>} : vector<128x8xbf16>, vector<8x32xbf16>, vector<128x32xf32> -> vector<128x32xf32>
    %c0_3 = arith.constant 0 : index
    %c0_4 = arith.constant 0 : index
    %4 = vector.load %arg3[%c0_3, %c0_4] : memref<1x32xf32, #tpu.memory_space<vmem>>, vector<1x32xf32>
    %5 = vector.broadcast %4 : vector<1x32xf32> to vector<128x32xf32>
    %6 = arith.addf %3, %5 : vector<128x32xf32>
    %cst_5 = arith.constant 0.000000e+00 : f32
    %7 = vector.broadcast %cst_5 : f32 to vector<128x32xf32>
    %8 = arith.maximumf %6, %7 : vector<128x32xf32>
    %9 = arith.truncf %8 : vector<128x32xf32> to vector<128x32xbf16>
    %c0_6 = arith.constant 0 : index
    %c0_7 = arith.constant 0 : index
    %10 = vector.load %arg4[%c0_6, %c0_7] : memref<32x128xbf16, #tpu.memory_space<vmem>>, vector<32x128xbf16>
    %cst_8 = arith.constant dense<0.000000e+00> : vector<128x128xf32>
    %11 = tpu.matmul %9, %10, %cst_8 {dimension_numbers = #tpu.dot_dimension_numbers<[1], [0], [0], [1], [0, 0, 1, 1], [], []>} : vector<128x32xbf16>, vector<32x128xbf16>, vector<128x128xf32> -> vector<128x128xf32>
    %c0_9 = arith.constant 0 : index
    %c0_10 = arith.constant 0 : index
    %12 = vector.load %arg5[%c0_9, %c0_10] : memref<1x128xf32, #tpu.memory_space<vmem>>, vector<1x128xf32>
    %13 = vector.broadcast %12 : vector<1x128xf32> to vector<128x128xf32>
    %14 = arith.addf %11, %13 : vector<128x128xf32>
    %cst_11 = arith.constant dense<0xFF800000> : vector<128xf32>
    %15 = vector.multi_reduction <maximumf>, %14, %cst_11 [1] : vector<128x128xf32> to vector<128xf32>
    %16 = vector.shape_cast %15 : vector<128xf32> to vector<128x1xf32>
    %17 = vector.broadcast %16 : vector<128x1xf32> to vector<128x128xf32>
    %18 = arith.subf %14, %17 : vector<128x128xf32>
    %19 = math.exp %18 : vector<128x128xf32>
    %cst_12 = arith.constant dense<0.000000e+00> : vector<128xf32>
    %20 = vector.multi_reduction <add>, %19, %cst_12 [1] : vector<128x128xf32> to vector<128xf32>
    %21 = vector.shape_cast %20 : vector<128xf32> to vector<128x1xf32>
    %22 = vector.broadcast %21 : vector<128x1xf32> to vector<128x128xf32>
    %23 = arith.divf %19, %22 : vector<128x128xf32>
    %c0_13 = arith.constant 0 : index
    %c0_14 = arith.constant 0 : index
    %24 = vector.load %arg6[%c0_13, %c0_14] : memref<128x128xf32, #tpu.memory_space<vmem>>, vector<128x128xf32>
    tpu.vector_store %arg6[%c0_13, %c0_14], %23 {strides = array<i32>} : memref<128x128xf32, #tpu.memory_space<vmem>>, vector<128x128xf32>,
    return
  }
  func.func @transform_0(%arg0: i32) -> (i32, i32) {
    %c0_i32 = arith.constant 0 : i32
    %c0_i32_0 = arith.constant 0 : i32
    return %arg0, %c0_i32 : i32, i32
  }
  func.func @transform_1(%arg0: i32) -> (i32, i32) {
    %c0_i32 = arith.constant 0 : i32
    %c0_i32_0 = arith.constant 0 : i32
    %c0_i32_1 = arith.constant 0 : i32
    return %c0_i32, %c0_i32_0 : i32, i32
  }
  func.func @transform_2(%arg0: i32) -> (i32, i32) {
    %c0_i32 = arith.constant 0 : i32
    %c0_i32_0 = arith.constant 0 : i32
    %c0_i32_1 = arith.constant 0 : i32
    return %c0_i32, %c0_i32_0 : i32, i32
  }
  func.func @transform_3(%arg0: i32) -> (i32, i32) {
    %c0_i32 = arith.constant 0 : i32
    %c0_i32_0 = arith.constant 0 : i32
    %c0_i32_1 = arith.constant 0 : i32
    return %c0_i32, %c0_i32_0 : i32, i32
  }
  func.func @transform_4(%arg0: i32) -> (i32, i32) {
    %c0_i32 = arith.constant 0 : i32
    %c0_i32_0 = arith.constant 0 : i32
    %c0_i32_1 = arith.constant 0 : i32
    return %c0_i32, %c0_i32_0 : i32, i32
  }
  func.func @transform_5(%arg0: i32) -> (i32, i32) {
    %c0_i32 = arith.constant 0 : i32
    %c0_i32_0 = arith.constant 0 : i32
    return %arg0, %c0_i32 : i32, i32
  }
}

</mosaic_0001>

<llo_original>
// kernel: tpu_custom_call.1
$region0: #{tpu_custom_call.1}
  #allocation0 [shape = 'u32[]', space=smem, size = 0x4, offset = 0x4, fixed_abs, tag = 'smem constant byte address 0x4 - core index']
  #allocation1 [shape = 'u32[144,128]{1,0:T(1,128)}', space=vmem, size = 0x12000, scoped, tag = 'internal scratch']
  %s0 = inlined_call_operand.vmem [shape: f32[256,8], index: 0, kind: input, shape index: {}]
  %s1 = inlined_call_operand.vmem [shape: bf16[8,32], index: 1, kind: input, shape index: {}]
  %s2 = inlined_call_operand.vmem [shape: f32[1,32], index: 2, kind: input, shape index: {}]
  %s3 = inlined_call_operand.vmem [shape: bf16[32,128], index: 3, kind: input, shape index: {}]
  %s4 = inlined_call_operand.vmem [shape: f32[1,128], index: 4, kind: input, shape index: {}]
  %s5 = inlined_call_operand.hbm [shape: f32[256,128], index: 5, kind: output, shape index: {}]
  %s6 = sld [smem:[#allocation0]]
  $region53: #{tpu_custom_call.1} parent=0
    _
  %s8 = ssub.s32 1, %s6
  %s9 = scalar_select 0, %s8, %s6
  $region1: #{tpu_custom_call.1} parent=0
    #allocation2 [shape = 'u8[131072]{0}', space=vmem, size = 0x20000, scoped, tag = 'output window, operand 0']
    #allocation3 [shape = 's32[2]{0}', space=sflag, size = 0x8, scoped, tag = 'scoped memory for tpu_custom_call.1']
    %10 = vsyncpa [#allocation3], 0
    %s11 = scalar_lea.sflag [#allocation3], 1
    %12 = vsyncpa %s11, 0
    loop: start=0, step=1, limit=4
    $region2: #{tpu_custom_call.1} parent=1 // loop_pre_header
      _
    $region3: #{tpu_custom_call.1} parent=1 // loop_header
      %s14 = sphi 0, %s18
      %p15 = scmp.ge.s32.totalorder %s14, 4
      %s24 = sphi 0, %s26
      %s27 = sphi 0, %s24
      %s28 = sphi 0, %s27
      %s44 = sphi 0, %s28
      %s48 = sphi 0, %s48
      %s50 = sphi 0, %s48
      %s51 = sphi 0, %s50
      %s65 = sphi 0, %s51
      %s69 = sphi 0, %s69
      %s71 = sphi 0, %s69
      %s72 = sphi 0, %s71
      %s86 = sphi 0, %s72
      %s90 = sphi 0, %s90
      %s92 = sphi 0, %s90
      %s93 = sphi 0, %s92
      %s107 = sphi 0, %s93
      %s111 = sphi 0, %s111
      %s113 = sphi 0, %s111
      %s114 = sphi 0, %s113
      %s128 = sphi 0, %s114
      %s134 = sphi 0, %s136
      %s137 = sphi 0, %s134
      %s138 = sphi 0, %s137
      %s154 = sphi 0, %s138
    $region4: #{tpu_custom_call.1} parent=1 // loop_header_branch
      %17 = sbr.rel (%p15) target = $region8
    $region5: #{tpu_custom_call.1} parent=1 // loop_body
      %s19 = ssub.s32 %s14, 1
      %s20 = ssub.s32 %s14, 2
      %s21 = sadd.s32 %s14, 1
      %s22 = ssub.s32 %s14, %s21
      %p23 = scmp.eq.s32.totalorder %s22, 0
      %s25 = sadd.s32 %s24, 1
      %s26 = scalar_select %p23, %s24, %s25
      %p29 = pneg %p23
      %p30 = scmp.eq.s32.totalorder %s14, 1
      %p31 = por %p29, %p30
      %p32 = scmp.ne.s32.totalorder %s24, %s27
      %p33 = scmp.eq.s32.totalorder %s14, 0
      %p34 = por %p32, %p33
      %p35 = scmp.ne.s32.totalorder %s24, %s27
      %p36 = scmp.eq.s32.totalorder %s19, 1
      %p37 = por %p35, %p36
      %p38 = scmp.ne.s32.totalorder %s27, %s28
      %p39 = scmp.eq.s32.totalorder %s19, 0
      %p40 = por %p38, %p39
      %p41 = scmp.ne.s32.totalorder %s27, %s28
      %p42 = scmp.eq.s32.totalorder %s20, 1
      %p43 = por %p41, %p42
      %p45 = scmp.ne.s32.totalorder %s28, %s44
      %p46 = scmp.eq.s32.totalorder %s20, 0
      %p47 = por %p45, %p46
      %s49 = sadd.s32 %s48, 1
      %p52 = scmp.eq.s32.totalorder %s14, 1
      %p53 = scmp.ne.s32.totalorder %s48, %s50
      %p54 = scmp.eq.s32.totalorder %s14, 0
      %p55 = por %p53, %p54
      %p56 = scmp.ne.s32.totalorder %s48, %s50
      %p57 = scmp.eq.s32.totalorder %s19, 1
      %p58 = por %p56, %p57
      %p59 = scmp.ne.s32.totalorder %s50, %s51
      %p60 = scmp.eq.s32.totalorder %s19, 0
      %p61 = por %p59, %p60
      %p62 = scmp.ne.s32.totalorder %s50, %s51
      %p63 = scmp.eq.s32.totalorder %s20, 1
      %p64 = por %p62, %p63
      %p66 = scmp.ne.s32.totalorder %s51, %s65
      %p67 = scmp.eq.s32.totalorder %s20, 0
      %p68 = por %p66, %p67
      %s70 = sadd.s32 %s69, 1
      %p73 = scmp.eq.s32.totalorder %s14, 1
      %p74 = scmp.ne.s32.totalorder %s69, %s71
      %p75 = scmp.eq.s32.totalorder %s14, 0
      %p76 = por %p74, %p75
      %p77 = scmp.ne.s32.totalorder %s69, %s71
      %p78 = scmp.eq.s32.totalorder %s19, 1
      %p79 = por %p77, %p78
      %p80 = scmp.ne.s32.totalorder %s71, %s72
      %p81 = scmp.eq.s32.totalorder %s19, 0
      %p82 = por %p80, %p81
      %p83 = scmp.ne.s32.totalorder %s71, %s72
      %p84 = scmp.eq.s32.totalorder %s20, 1
      %p85 = por %p83, %p84
      %p87 = scmp.ne.s32.totalorder %s72, %s86
      %p88 = scmp.eq.s32.totalorder %s20, 0
      %p89 = por %p87, %p88
      %s91 = sadd.s32 %s90, 1
      %p94 = scmp.eq.s32.totalorder %s14, 1
      %p95 = scmp.ne.s32.totalorder %s90, %s92
      %p96 = scmp.eq.s32.totalorder %s14, 0
      %p97 = por %p95, %p96
      %p98 = scmp.ne.s32.totalorder %s90, %s92
      %p99 = scmp.eq.s32.totalorder %s19, 1
      %p100 = por %p98, %p99
      %p101 = scmp.ne.s32.totalorder %s92, %s93
      %p102 = scmp.eq.s32.totalorder %s19, 0
      %p103 = por %p101, %p102
      %p104 = scmp.ne.s32.totalorder %s92, %s93
      %p105 = scmp.eq.s32.totalorder %s20, 1
      %p106 = por %p104, %p105
      %p108 = scmp.ne.s32.totalorder %s93, %s107
      %p109 = scmp.eq.s32.totalorder %s20, 0
      %p110 = por %p108, %p109
      %s112 = sadd.s32 %s111, 1
      %p115 = scmp.eq.s32.totalorder %s14, 1
      %p116 = scmp.ne.s32.totalorder %s111, %s113
      %p117 = scmp.eq.s32.totalorder %s14, 0
      %p118 = por %p116, %p117
      %p119 = scmp.ne.s32.totalorder %s111, %s113
      %p120 = scmp.eq.s32.totalorder %s19, 1
      %p121 = por %p119, %p120
      %p122 = scmp.ne.s32.totalorder %s113, %s114
      %p123 = scmp.eq.s32.totalorder %s19, 0
      %p124 = por %p122, %p123
      %p125 = scmp.ne.s32.totalorder %s113, %s114
      %p126 = scmp.eq.s32.totalorder %s20, 1
      %p127 = por %p125, %p126
      %p129 = scmp.ne.s32.totalorder %s114, %s128
      %p130 = scmp.eq.s32.totalorder %s20, 0
      %p131 = por %p129, %p130
      %s132 = ssub.s32 %s14, %s21
      %p133 = scmp.eq.s32.totalorder %s132, 0
      %s135 = sadd.s32 %s134, 1
      %s136 = scalar_select %p133, %s134, %s135
      %p139 = pneg %p133
      %p140 = scmp.eq.s32.totalorder %s14, 1
      %p141 = por %p139, %p140
      %p142 = scmp.ne.s32.totalorder %s134, %s137
      %p143 = scmp.eq.s32.totalorder %s14, 0
      %p144 = por %p142, %p143
      %p145 = scmp.ne.s32.totalorder %s134, %s137
      %p146 = scmp.eq.s32.totalorder %s19, 1
      %p147 = por %p145, %p146
      %p148 = scmp.ne.s32.totalorder %s137, %s138
      %p149 = scmp.eq.s32.totalorder %s19, 0
      %p150 = por %p148, %p149
      %p151 = scmp.ne.s32.totalorder %s137, %s138
      %p152 = scmp.eq.s32.totalorder %s20, 1
      %p153 = por %p151, %p152
      %p155 = scmp.ne.s32.totalorder %s138, %s154
      %p156 = scmp.eq.s32.totalorder %s20, 0
      %p157 = por %p155, %p156
      %p158 = scmp.le.s32.totalorder 1, %s14
      %p159 = scmp.lt.s32.totalorder %s14, 3
      %p160 = pnand %p158, %p159
      %p161 = pneg %p160
      // Predicated region
      $region9: #{tpu_custom_call.1} parent=5 // pred_check
        _
      $region10: #{tpu_custom_call.1} parent=5 // pred_check_branch
        %163 = sbr.rel (%p160) target = $region12
      $region11: #{tpu_custom_call.1} parent=5 // pred_region
        %s164 = ssub.s32 %s14, 1
        // Predicated region
        $region13: #{tpu_custom_call.1} parent=11 // pred_check
          %p165 = pneg %p61
        $region14: #{tpu_custom_call.1} parent=11 // pred_check_branch
          %167 = sbr.rel (%p165) target = $region16
        $region15: #{tpu_custom_call.1} parent=11 // pred_region
          _
        $region16: #{tpu_custom_call.1} parent=11 // pred_fallthru
          _
        // Predicated region
        $region17: #{tpu_custom_call.1} parent=11 // pred_check
          %p168 = pneg %p82
        $region18: #{tpu_custom_call.1} parent=11 // pred_check_branch
          %170 = sbr.rel (%p168) target = $region20
        $region19: #{tpu_custom_call.1} parent=11 // pred_region
          _
        $region20: #{tpu_custom_call.1} parent=11 // pred_fallthru
          _
        // Predicated region
        $region21: #{tpu_custom_call.1} parent=11 // pred_check
          %p171 = pneg %p103
        $region22: #{tpu_custom_call.1} parent=11 // pred_check_branch
          %173 = sbr.rel (%p171) target = $region24
        $region23: #{tpu_custom_call.1} parent=11 // pred_region
          _
        $region24: #{tpu_custom_call.1} parent=11 // pred_fallthru
          _
        // Predicated region
        $region25: #{tpu_custom_call.1} parent=11 // pred_check
          %p174 = pneg %p124
        $region26: #{tpu_custom_call.1} parent=11 // pred_check_branch
          %176 = sbr.rel (%p174) target = $region28
        $region27: #{tpu_custom_call.1} parent=11 // pred_region
          _
        $region28: #{tpu_custom_call.1} parent=11 // pred_fallthru
          _
      $region12: #{tpu_custom_call.1} parent=5 // pred_fallthru
        _
      %p177 = scmp.lt.s32.totalorder %s14, 2
      // Predicated region
      $region29: #{tpu_custom_call.1} parent=5 // pred_check
        %p178 = pneg %p177
      $region30: #{tpu_custom_call.1} parent=5 // pred_check_branch
        %180 = sbr.rel (%p178) target = $region32
      $region31: #{tpu_custom_call.1} parent=5 // pred_region
        // Predicated region
        $region33: #{tpu_custom_call.1} parent=31 // pred_check
          %p181 = pneg %p34
        $region34: #{tpu_custom_call.1} parent=31 // pred_check_branch
          %183 = sbr.rel (%p181) target = $region36
        $region35: #{tpu_custom_call.1} parent=31 // pred_region
          %s184 = smul.u32 16, %s14
          %p185 = scmp.lt.s32.totalorder %s184, 31
          %s186 = scalar_select %p185, %s184, 31
          %s187 = smul.addr %s186, 8
          %s188 = scalar_lea.vmem %s0, %s187
          %s189 = smul.u32 16, %s14
        $region36: #{tpu_custom_call.1} parent=31 // pred_fallthru
          _
      $region32: #{tpu_custom_call.1} parent=5 // pred_fallthru
        _
      %p190 = scmp.le.s32.totalorder 1, %s14
      %p191 = scmp.lt.s32.totalorder %s14, 3
      %p192 = pnand %p190, %p191
      %p193 = pneg %p192
      // Predicated region
      $region37: #{tpu_custom_call.1} parent=5 // pred_check
        _
      $region38: #{tpu_custom_call.1} parent=5 // pred_check_branch
        %195 = sbr.rel (%p192) target = $region40
      $region39: #{tpu_custom_call.1} parent=5 // pred_region
        %s196 = ssub.s32 %s14, 1
        %s197 = smul.u32 16, %s19
        %p198 = scmp.lt.s32.totalorder %s197, 31
        %s199 = scalar_select %p198, %s197, 31
        %s200 = smul.addr %s199, 8
        %s201 = scalar_lea.vmem %s0, %s200
        %p202 = pneg %p40
        %p203 = pneg %p37
        %p204 = pneg %p61
        %p205 = pneg %p58
        %p206 = pneg %p82
        %p207 = pneg %p79
        %p208 = pneg %p103
        %p209 = pneg %p100
        %p210 = pneg %p124
        %p211 = pneg %p121
        %p212 = pneg %p150
        %p213 = pneg %p147
        %s214 = sand.u32 %s137, 1
        %s215 = scalar_lea.sflag [#allocation3], %s214
        %s216 = sand.u32 %s137, 1
        %s217 = smul.addr %s216, 128
        %s218 = scalar_lea.vmem [#allocation2], %s217
        %s219 = smul.u32 16, %s19
        %p220 = scmp.lt.s32.totalorder %s219, 31
        %s221 = scalar_select %p220, %s219, 31
        %s222 = smul.addr %s221, 8
        %s223 = scalar_lea.vmem %s0, %s222
        %s224 = smul.u32 16, %s19
        %s225 = smul.u32 16, %s19
        %v227 = vld [vmem:[%s223] sm:$0xff]
        %v228 = vld [vmem:[%s223 + $0x8] sm:$0xff]
        %v229 = vld [vmem:[%s223 + $0x10] sm:$0xff]
        %v230 = vld [vmem:[%s223 + $0x18] sm:$0xff]
        %v231 = vld [vmem:[%s223 + $0x20] sm:$0xff]
        %v232 = vld [vmem:[%s223 + $0x28] sm:$0xff]
        %v233 = vld [vmem:[%s223 + $0x30] sm:$0xff]
        %v234 = vld [vmem:[%s223 + $0x38] sm:$0xff]
        %v235 = vld [vmem:[%s223 + $0x40] sm:$0xff]
        %v236 = vld [vmem:[%s223 + $0x48] sm:$0xff]
        %v237 = vld [vmem:[%s223 + $0x50] sm:$0xff]
        %v238 = vld [vmem:[%s223 + $0x58] sm:$0xff]
        %v239 = vld [vmem:[%s223 + $0x60] sm:$0xff]
        %v240 = vld [vmem:[%s223 + $0x68] sm:$0xff]
        %v241 = vld [vmem:[%s223 + $0x70] sm:$0xff]
        %v242 = vld [vmem:[%s223 + $0x78] sm:$0xff]
        %v243 = vpack.c.bf16 %v228, %v227
        %v244 = vpack.c.bf16 %v230, %v229
        %v245 = vpack.c.bf16 %v232, %v231
        %v246 = vpack.c.bf16 %v234, %v233
        %v247 = vpack.c.bf16 %v236, %v235
        %v248 = vpack.c.bf16 %v238, %v237
        %v249 = vpack.c.bf16 %v240, %v239
        %v250 = vpack.c.bf16 %v242, %v241
        %v251 = vld [vmem:[%s1] sm:$0xf]
        %v252 = vld [vmem:[%s2] sm:$0x1]
        %v254 = vlaneseq
        %v255 = vshrl.u32 %v254, 7
        %v256 = vsub.s32 0, %v255
        %v257 = vrot.slane %v252, %v256
        %vm259 = vcmask 64512
        %v261 = vsel %vm259, %v243, 0
        %v264 = vsel %vm259, %v244, 0
        %v267 = vsel %vm259, %v245, 0
        %v270 = vsel %vm259, %v246, 0
        %v273 = vsel %vm259, %v247, 0
        %v276 = vsel %vm259, %v248, 0
        %v279 = vsel %vm259, %v249, 0
        %v282 = vsel %vm259, %v250, 0
        %vm284 = vcmask 1043456
        %v286 = vsel %vm284, %v251, 0
        %288 = vmatprep.subr.bf16.mxu0 0
        %289 = vmatpush1.bf16.msra.mxu0 %v286
        %290 = vmatprep.subr.bf16.mxu0 0
        %291 = vmatpush1.bf16.msra.mxu0 0
        %292 = vmatprep.subr.bf16.mxu0 0
        %293 = vmatpush1.bf16.msra.mxu0 0
        %294 = vmatprep.subr.bf16.mxu0 0
        %295 = vmatpush1.bf16.msra.mxu0 0
        %296 = vmatprep.subr.bf16.mxu0 0
        %297 = vmatpush1.bf16.msra.mxu0 0
        %298 = vmatprep.subr.bf16.mxu0 0
        %299 = vmatpush1.bf16.msra.mxu0 0
        %300 = vmatprep.subr.bf16.mxu0 0
        %301 = vmatpush1.bf16.msra.mxu0 0
        %302 = vmatprep.subr.bf16.mxu0 0
        %303 = vmatpush1.bf16.msra.mxu0 0
        %304 = vmatprep.subr.bf16.mxu0 0
        %305 = vmatpush1.bf16.msra.mxu0 0
        %306 = vmatprep.subr.bf16.mxu0 0
        %307 = vmatpush1.bf16.msra.mxu0 0
        %308 = vmatprep.subr.bf16.mxu0 0
        %309 = vmatpush1.bf16.msra.mxu0 0
        %310 = vmatprep.subr.bf16.mxu0 0
        %311 = vmatpush1.bf16.msra.mxu0 0
        %312 = vmatprep.subr.bf16.mxu0 0
        %313 = vmatpush1.bf16.msra.mxu0 0
        %314 = vmatprep.subr.bf16.mxu0 0
        %315 = vmatpush1.bf16.msra.mxu0 0
        %316 = vmatprep.subr.bf16.mxu0 0
        %317 = vmatpush1.bf16.msra.mxu0 0
        %318 = vmatprep.subr.bf16.mxu0 0
        %319 = vmatpush1.bf16.msra.mxu0 0
        %320 = vmatprep.mubr.bf16.mxu0 0
        %321 = vmatmul.mubr.bf16.gmra.mrb[0].mxu0 %v261
        %v322 = vpop.f32.mrb[0].mxu0
        %v323 = vadd.f32 %v257, %v322
        %v324 = vpop.f32.mrb[0].mxu0
        %v325 = vpop.f32.mrb[0].mxu0
        %v326 = vadd.f32 %v257, %v325
        %v327 = vpop.f32.mrb[0].mxu0
        %328 = vmatprep.mubr.bf16.mxu0 0
        %329 = vmatmul.mubr.bf16.gmra.mrb[0].mxu0 %v264
        %v330 = vpop.f32.mrb[0].mxu0
        %v331 = vadd.f32 %v257, %v330
        %v332 = vpop.f32.mrb[0].mxu0
        %v333 = vpop.f32.mrb[0].mxu0
        %v334 = vadd.f32 %v257, %v333
        %v335 = vpop.f32.mrb[0].mxu0
        %336 = vmatprep.mubr.bf16.mxu0 0
        %337 = vmatmul.mubr.bf16.gmra.mrb[0].mxu0 %v267
        %v338 = vpop.f32.mrb[0].mxu0
        %v339 = vadd.f32 %v257, %v338
        %v340 = vpop.f32.mrb[0].mxu0
        %v341 = vpop.f32.mrb[0].mxu0
        %v342 = vadd.f32 %v257, %v341
        %v343 = vpop.f32.mrb[0].mxu0
        %344 = vmatprep.mubr.bf16.mxu0 0
        %345 = vmatmul.mubr.bf16.gmra.mrb[0].mxu0 %v270
        %v346 = vpop.f32.mrb[0].mxu0
        %v347 = vadd.f32 %v257, %v346
        %v348 = vpop.f32.mrb[0].mxu0
        %v349 = vpop.f32.mrb[0].mxu0
        %v350 = vadd.f32 %v257, %v349
        %v351 = vpop.f32.mrb[0].mxu0
        %352 = vmatprep.mubr.bf16.mxu0 0
        %353 = vmatmul.mubr.bf16.gmra.mrb[0].mxu0 %v273
        %v354 = vpop.f32.mrb[0].mxu0
        %v355 = vadd.f32 %v257, %v354
        %v356 = vpop.f32.mrb[0].mxu0
        %v357 = vpop.f32.mrb[0].mxu0
        %v358 = vadd.f32 %v257, %v357
        %v359 = vpop.f32.mrb[0].mxu0
        %360 = vmatprep.mubr.bf16.mxu0 0
        %361 = vmatmul.mubr.bf16.gmra.mrb[0].mxu0 %v276
        %v362 = vpop.f32.mrb[0].mxu0
        %v363 = vadd.f32 %v257, %v362
        %v364 = vpop.f32.mrb[0].mxu0
        %v365 = vpop.f32.mrb[0].mxu0
        %v366 = vadd.f32 %v257, %v365
        %v367 = vpop.f32.mrb[0].mxu0
        %368 = vmatprep.mubr.bf16.mxu0 0
        %369 = vmatmul.mubr.bf16.gmra.mrb[0].mxu0 %v279
        %v370 = vpop.f32.mrb[0].mxu0
        %v371 = vadd.f32 %v257, %v370
        %v372 = vpop.f32.mrb[0].mxu0
        %v373 = vpop.f32.mrb[0].mxu0
        %v374 = vadd.f32 %v257, %v373
        %v375 = vpop.f32.mrb[0].mxu0
        %376 = vmatprep.mubr.bf16.mxu0 0
        %377 = vmatmul.mubr.bf16.gmra.mrb[0].mxu0 %v282
        %v378 = vpop.f32.mrb[0].mxu0
        %v379 = vadd.f32 %v257, %v378
        %v380 = vpop.f32.mrb[0].mxu0
        %v381 = vpop.f32.mrb[0].mxu0
        %v382 = vadd.f32 %v257, %v381
        %v383 = vpop.f32.mrb[0].mxu0
        %384 = vdwg.mxu0
        %v385 = vmax.f32 %v323, 0.0
        %v386 = vmax.f32 %v326, 0.0
        %v387 = vmax.f32 %v331, 0.0
        %v388 = vmax.f32 %v334, 0.0
        %v389 = vmax.f32 %v339, 0.0
        %v390 = vmax.f32 %v342, 0.0
        %v391 = vmax.f32 %v347, 0.0
        %v392 = vmax.f32 %v350, 0.0
        %v393 = vmax.f32 %v355, 0.0
        %v394 = vmax.f32 %v358, 0.0
        %v395 = vmax.f32 %v363, 0.0
        %v396 = vmax.f32 %v366, 0.0
        %v397 = vmax.f32 %v371, 0.0
        %v398 = vmax.f32 %v374, 0.0
        %v399 = vmax.f32 %v379, 0.0
        %v400 = vmax.f32 %v382, 0.0
        %v401 = vpack.c.bf16 %v386, %v385
        %v402 = vpack.c.bf16 %v388, %v387
        %v403 = vpack.c.bf16 %v390, %v389
        %v404 = vpack.c.bf16 %v392, %v391
        %v405 = vpack.c.bf16 %v394, %v393
        %v406 = vpack.c.bf16 %v396, %v395
        %v407 = vpack.c.bf16 %v398, %v397
        %v408 = vpack.c.bf16 %v400, %v399
        %v409 = vld [vmem:[%s3] sm:$0xf]
        %v410 = vld [vmem:[%s3 + $0x4] sm:$0xf]
        %v411 = vld [vmem:[%s3 + $0x8] sm:$0xf]
        %v412 = vld [vmem:[%s3 + $0xc] sm:$0xf]
        %v413 = vld [vmem:[%s4] sm:$0x1]
        %v415 = vlaneseq
        %v416 = vshrl.u32 %v415, 7
        %v417 = vsub.s32 0, %v416
        %v418 = vrot.slane %v413, %v417
        %v424 = vunpack.c.l.b16 %v409
        %v425 = vunpack.c.l.b16 %v410
        %v426 = vunpack.c.l.b16 %v411
        %v427 = vunpack.c.l.b16 %v412
        %v428 = vpack.c.b16 %v425, %v424
        %v429 = vpack.c.b16 %v427, %v426
        %vm432 = vcmask 261120
        %v434 = vsel %vm432, %v401, 0
        %v437 = vsel %vm432, %v402, 0
        %v440 = vsel %vm432, %v403, 0
        %v443 = vsel %vm432, %v404, 0
        %v446 = vsel %vm432, %v405, 0
        %v449 = vsel %vm432, %v406, 0
        %v452 = vsel %vm432, %v407, 0
        %v455 = vsel %vm432, %v408, 0
        %457 = vmatprep.subr.bf16.mxu0 0
        %458 = vmatpush1.bf16.msra.mxu0 %v428
        %459 = vmatprep.subr.bf16.mxu0 0
        %460 = vmatpush1.bf16.msra.mxu0 %v429
        %461 = vmatprep.subr.bf16.mxu0 0
        %462 = vmatpush1.bf16.msra.mxu0 0
        %463 = vmatprep.subr.bf16.mxu0 0
        %464 = vmatpush1.bf16.msra.mxu0 0
        %465 = vmatprep.subr.bf16.mxu0 0
        %466 = vmatpush1.bf16.msra.mxu0 0
        %467 = vmatprep.subr.bf16.mxu0 0
        %468 = vmatpush1.bf16.msra.mxu0 0
        %469 = vmatprep.subr.bf16.mxu0 0
        %470 = vmatpush1.bf16.msra.mxu0 0
        %471 = vmatprep.subr.bf16.mxu0 0
        %472 = vmatpush1.bf16.msra.mxu0 0
        %473 = vmatprep.subr.bf16.mxu0 0
        %474 = vmatpush1.bf16.msra.mxu0 0
        %475 = vmatprep.subr.bf16.mxu0 0
        %476 = vmatpush1.bf16.msra.mxu0 0
        %477 = vmatprep.subr.bf16.mxu0 0
        %478 = vmatpush1.bf16.msra.mxu0 0
        %479 = vmatprep.subr.bf16.mxu0 0
        %480 = vmatpush1.bf16.msra.mxu0 0
        %481 = vmatprep.subr.bf16.mxu0 0
        %482 = vmatpush1.bf16.msra.mxu0 0
        %483 = vmatprep.subr.bf16.mxu0 0
        %484 = vmatpush1.bf16.msra.mxu0 0
        %485 = vmatprep.subr.bf16.mxu0 0
        %486 = vmatpush1.bf16.msra.mxu0 0
        %487 = vmatprep.subr.bf16.mxu0 0
        %488 = vmatpush1.bf16.msra.mxu0 0
        %489 = vmatprep.mubr.bf16.mxu0 0
        %490 = vmatmul.mubr.bf16.gmra.mrb[0].mxu0 %v434
        %v491 = vpop.f32.mrb[0].mxu0
        %v492 = vadd.f32 %v418, %v491
        %v493 = vpop.f32.mrb[0].mxu0
        %v494 = vpop.f32.mrb[0].mxu0
        %v495 = vadd.f32 %v418, %v494
        %v496 = vpop.f32.mrb[0].mxu0
        %497 = vmatprep.mubr.bf16.mxu0 0
        %498 = vmatmul.mubr.bf16.gmra.mrb[0].mxu0 %v437
        %v499 = vpop.f32.mrb[0].mxu0
        %v500 = vadd.f32 %v418, %v499
        %v501 = vpop.f32.mrb[0].mxu0
        %v502 = vpop.f32.mrb[0].mxu0
        %v503 = vadd.f32 %v418, %v502
        %v504 = vpop.f32.mrb[0].mxu0
        %505 = vmatprep.mubr.bf16.mxu0 0
        %506 = vmatmul.mubr.bf16.gmra.mrb[0].mxu0 %v440
        %v507 = vpop.f32.mrb[0].mxu0
        %v508 = vadd.f32 %v418, %v507
        %v509 = vpop.f32.mrb[0].mxu0
        %v510 = vpop.f32.mrb[0].mxu0
        %v511 = vadd.f32 %v418, %v510
        %v512 = vpop.f32.mrb[0].mxu0
        %513 = vmatprep.mubr.bf16.mxu0 0
        %514 = vmatmul.mubr.bf16.gmra.mrb[0].mxu0 %v443
        %v515 = vpop.f32.mrb[0].mxu0
        %v516 = vadd.f32 %v418, %v515
        %v517 = vpop.f32.mrb[0].mxu0
        %v518 = vpop.f32.mrb[0].mxu0
        %v519 = vadd.f32 %v418, %v518
        %v520 = vpop.f32.mrb[0].mxu0
        %521 = vmatprep.mubr.bf16.mxu0 0
        %522 = vmatmul.mubr.bf16.gmra.mrb[0].mxu0 %v446
        %v523 = vpop.f32.mrb[0].mxu0
        %v524 = vadd.f32 %v418, %v523
        %v525 = vpop.f32.mrb[0].mxu0
        %v526 = vpop.f32.mrb[0].mxu0
        %v527 = vadd.f32 %v418, %v526
        %v528 = vpop.f32.mrb[0].mxu0
        %529 = vmatprep.mubr.bf16.mxu0 0
        %530 = vmatmul.mubr.bf16.gmra.mrb[0].mxu0 %v449
        %v531 = vpop.f32.mrb[0].mxu0
        %v532 = vadd.f32 %v418, %v531
        %v533 = vpop.f32.mrb[0].mxu0
        %v534 = vpop.f32.mrb[0].mxu0
        %v535 = vadd.f32 %v418, %v534
        %v536 = vpop.f32.mrb[0].mxu0
        %537 = vmatprep.mubr.bf16.mxu0 0
        %538 = vmatmul.mubr.bf16.gmra.mrb[0].mxu0 %v452
        %v539 = vpop.f32.mrb[0].mxu0
        %v540 = vadd.f32 %v418, %v539
        %v541 = vpop.f32.mrb[0].mxu0
        %v542 = vpop.f32.mrb[0].mxu0
        %v543 = vadd.f32 %v418, %v542
        %v544 = vpop.f32.mrb[0].mxu0
        %545 = vmatprep.mubr.bf16.mxu0 0
        %546 = vmatmul.mubr.bf16.gmra.mrb[0].mxu0 %v455
        %v547 = vpop.f32.mrb[0].mxu0
        %v548 = vadd.f32 %v418, %v547
        %v549 = vpop.f32.mrb[0].mxu0
        %v550 = vpop.f32.mrb[0].mxu0
        %v551 = vadd.f32 %v418, %v550
        %v552 = vpop.f32.mrb[0].mxu0
        %553 = vdwg.mxu0
        %554 = vmax.xlane.f32.xlu0 %v492
        %v555 = vpop.xlane.xlu0 %554
        %556 = vmax.xlane.f32.xlu0 %v495
        %v557 = vpop.xlane.xlu0 %556
        %558 = vmax.xlane.f32.xlu0 %v500
        %v559 = vpop.xlane.xlu0 %558
        %560 = vmax.xlane.f32.xlu0 %v503
        %v561 = vpop.xlane.xlu0 %560
        %562 = vmax.xlane.f32.xlu0 %v508
        %v563 = vpop.xlane.xlu0 %562
        %564 = vmax.xlane.f32.xlu0 %v511
        %v565 = vpop.xlane.xlu0 %564
        %566 = vmax.xlane.f32.xlu0 %v516
        %v567 = vpop.xlane.xlu0 %566
        %568 = vmax.xlane.f32.xlu0 %v519
        %v569 = vpop.xlane.xlu0 %568
        %570 = vmax.xlane.f32.xlu0 %v524
        %v571 = vpop.xlane.xlu0 %570
        %572 = vmax.xlane.f32.xlu0 %v527
        %v573 = vpop.xlane.xlu0 %572
        %574 = vmax.xlane.f32.xlu0 %v532
        %v575 = vpop.xlane.xlu0 %574
        %576 = vmax.xlane.f32.xlu0 %v535
        %v577 = vpop.xlane.xlu0 %576
        %578 = vmax.xlane.f32.xlu0 %v540
        %v579 = vpop.xlane.xlu0 %578
        %580 = vmax.xlane.f32.xlu0 %v543
        %v581 = vpop.xlane.xlu0 %580
        %582 = vmax.xlane.f32.xlu0 %v548
        %v583 = vpop.xlane.xlu0 %582
        %584 = vmax.xlane.f32.xlu0 %v551
        %v585 = vpop.xlane.xlu0 %584
        %v586 = vsub.f32 %v492, %v555
        %v587 = vsub.f32 %v495, %v557
        %v588 = vsub.f32 %v500, %v559
        %v589 = vsub.f32 %v503, %v561
        %v590 = vsub.f32 %v508, %v563
        %v591 = vsub.f32 %v511, %v565
        %v592 = vsub.f32 %v516, %v567
        %v593 = vsub.f32 %v519, %v569
        %v594 = vsub.f32 %v524, %v571
        %v595 = vsub.f32 %v527, %v573
        %v596 = vsub.f32 %v532, %v575
        %v597 = vsub.f32 %v535, %v577
        %v598 = vsub.f32 %v540, %v579
        %v599 = vsub.f32 %v543, %v581
        %v600 = vsub.f32 %v548, %v583
        %v601 = vsub.f32 %v551, %v585
        %v602 = vmul.f32 %v586, 1.442695
        %v603 = vpow.pop %v602
        %v604 = vmul.f32 %v587, 1.442695
        %v605 = vpow.pop %v604
        %v606 = vmul.f32 %v588, 1.442695
        %v607 = vpow.pop %v606
        %v608 = vmul.f32 %v589, 1.442695
        %v609 = vpow.pop %v608
        %v610 = vmul.f32 %v590, 1.442695
        %v611 = vpow.pop %v610
        %v612 = vmul.f32 %v591, 1.442695
        %v613 = vpow.pop %v612
        %v614 = vmul.f32 %v592, 1.442695
        %v615 = vpow.pop %v614
        %v616 = vmul.f32 %v593, 1.442695
        %v617 = vpow.pop %v616
        %v618 = vmul.f32 %v594, 1.442695
        %v619 = vpow.pop %v618
        %v620 = vmul.f32 %v595, 1.442695
        %v621 = vpow.pop %v620
        %v622 = vmul.f32 %v596, 1.442695
        %v623 = vpow.pop %v622
        %v624 = vmul.f32 %v597, 1.442695
        %v625 = vpow.pop %v624
        %v626 = vmul.f32 %v598, 1.442695
        %v627 = vpow.pop %v626
        %v628 = vmul.f32 %v599, 1.442695
        %v629 = vpow.pop %v628
        %v630 = vmul.f32 %v600, 1.442695
        %v631 = vpow.pop %v630
        %v632 = vmul.f32 %v601, 1.442695
        %v633 = vpow.pop %v632
        %634 = vadd.xlane.f32.xlu0 %v603
        %v635 = vpop.xlane.xlu0 %634
        %636 = vadd.xlane.f32.xlu0 %v605
        %v637 = vpop.xlane.xlu0 %636
        %638 = vadd.xlane.f32.xlu0 %v607
        %v639 = vpop.xlane.xlu0 %638
        %640 = vadd.xlane.f32.xlu0 %v609
        %v641 = vpop.xlane.xlu0 %640
        %642 = vadd.xlane.f32.xlu0 %v611
        %v643 = vpop.xlane.xlu0 %642
        %644 = vadd.xlane.f32.xlu0 %v613
        %v645 = vpop.xlane.xlu0 %644
        %646 = vadd.xlane.f32.xlu0 %v615
        %v647 = vpop.xlane.xlu0 %646
        %648 = vadd.xlane.f32.xlu0 %v617
        %v649 = vpop.xlane.xlu0 %648
        %650 = vadd.xlane.f32.xlu0 %v619
        %v651 = vpop.xlane.xlu0 %650
        %652 = vadd.xlane.f32.xlu0 %v621
        %v653 = vpop.xlane.xlu0 %652
        %654 = vadd.xlane.f32.xlu0 %v623
        %v655 = vpop.xlane.xlu0 %654
        %656 = vadd.xlane.f32.xlu0 %v625
        %v657 = vpop.xlane.xlu0 %656
        %658 = vadd.xlane.f32.xlu0 %v627
        %v659 = vpop.xlane.xlu0 %658
        %660 = vadd.xlane.f32.xlu0 %v629
        %v661 = vpop.xlane.xlu0 %660
        %662 = vadd.xlane.f32.xlu0 %v631
        %v663 = vpop.xlane.xlu0 %662
        %664 = vadd.xlane.f32.xlu0 %v633
        %v665 = vpop.xlane.xlu0 %664
        %v666 = vrcp.pop %v635
        %v667 = vmul.f32 %v603, %v666
        %v668 = vrcp.pop %v637
        %v669 = vmul.f32 %v605, %v668
        %v670 = vrcp.pop %v639
        %v671 = vmul.f32 %v607, %v670
        %v672 = vrcp.pop %v641
        %v673 = vmul.f32 %v609, %v672
        %v674 = vrcp.pop %v643
        %v675 = vmul.f32 %v611, %v674
        %v676 = vrcp.pop %v645
        %v677 = vmul.f32 %v613, %v676
        %v678 = vrcp.pop %v647
        %v679 = vmul.f32 %v615, %v678
        %v680 = vrcp.pop %v649
        %v681 = vmul.f32 %v617, %v680
        %v682 = vrcp.pop %v651
        %v683 = vmul.f32 %v619, %v682
        %v684 = vrcp.pop %v653
        %v685 = vmul.f32 %v621, %v684
        %v686 = vrcp.pop %v655
        %v687 = vmul.f32 %v623, %v686
        %v688 = vrcp.pop %v657
        %v689 = vmul.f32 %v625, %v688
        %v690 = vrcp.pop %v659
        %v691 = vmul.f32 %v627, %v690
        %v692 = vrcp.pop %v661
        %v693 = vmul.f32 %v629, %v692
        %v694 = vrcp.pop %v663
        %v695 = vmul.f32 %v631, %v694
        %v696 = vrcp.pop %v665
        %v697 = vmul.f32 %v633, %v696
        %698 = vst [vmem:[%s218] sm:$0xff] %v667
        %699 = vst [vmem:[%s218 + $0x8] sm:$0xff] %v669
        %700 = vst [vmem:[%s218 + $0x10] sm:$0xff] %v671
        %701 = vst [vmem:[%s218 + $0x18] sm:$0xff] %v673
        %702 = vst [vmem:[%s218 + $0x20] sm:$0xff] %v675
        %703 = vst [vmem:[%s218 + $0x28] sm:$0xff] %v677
        %704 = vst [vmem:[%s218 + $0x30] sm:$0xff] %v679
        %705 = vst [vmem:[%s218 + $0x38] sm:$0xff] %v681
        %706 = vst [vmem:[%s218 + $0x40] sm:$0xff] %v683
        %707 = vst [vmem:[%s218 + $0x48] sm:$0xff] %v685
        %708 = vst [vmem:[%s218 + $0x50] sm:$0xff] %v687
        %709 = vst [vmem:[%s218 + $0x58] sm:$0xff] %v689
        %710 = vst [vmem:[%s218 + $0x60] sm:$0xff] %v691
        %711 = vst [vmem:[%s218 + $0x68] sm:$0xff] %v693
        %712 = vst [vmem:[%s218 + $0x70] sm:$0xff] %v695
        %713 = vst [vmem:[%s218 + $0x78] sm:$0xff] %v697
        %s714 = sand.u32 %s137, 1
        %s715 = scalar_lea.sflag [#allocation3], %s714
        %s716 = sand.u32 %s137, 1
        %s717 = smul.addr %s716, 128
        %s718 = scalar_lea.vmem [#allocation2], %s717
        // Predicated region
        $region41: #{tpu_custom_call.1} parent=39 // pred_check
          %p719 = pneg %p147
        $region42: #{tpu_custom_call.1} parent=39 // pred_check_branch
          %721 = sbr.rel (%p719) target = $region44
        $region43: #{tpu_custom_call.1} parent=39 // pred_region
          %s722 = smul.u32 16, %s19
          %s724 = ssub.s32 2048, 2048
          %725 = vsyncadd %s715, %s724
          %s726 = smul.addr %s722, 128
          %s727 = scalar_lea.hbm %s5, %s726
          %s728 = sshll.u32 %s718, 4
          %s729 = int_to_ptr.vmem [resolvable:$true] %s728
          %734 = dma.vmem_to_hbm [thread:$0]  %s729, 2048, %s727, %s715, 128, 128, 8
        $region44: #{tpu_custom_call.1} parent=39 // pred_fallthru
          _
      $region40: #{tpu_custom_call.1} parent=5 // pred_fallthru
        _
      %p735 = scmp.le.s32.totalorder 2, %s14
      // Predicated region
      $region45: #{tpu_custom_call.1} parent=5 // pred_check
        %p736 = pneg %p735
      $region46: #{tpu_custom_call.1} parent=5 // pred_check_branch
        %738 = sbr.rel (%p736) target = $region48
      $region47: #{tpu_custom_call.1} parent=5 // pred_region
        %s739 = ssub.s32 %s14, 2
        // Predicated region
        $region49: #{tpu_custom_call.1} parent=47 // pred_check
          %p740 = pneg %p153
        $region50: #{tpu_custom_call.1} parent=47 // pred_check_branch
          %742 = sbr.rel (%p740) target = $region52
        $region51: #{tpu_custom_call.1} parent=47 // pred_region
          %s743 = sand.u32 %s138, 1
          %s744 = scalar_lea.sflag [#allocation3], %s743
          %s745 = sand.u32 %s138, 1
          %s746 = smul.addr %s745, 128
          %s747 = scalar_lea.vmem [#allocation2], %s746
          %748 = dma.done %s744, 2048
        $region52: #{tpu_custom_call.1} parent=47 // pred_fallthru
          _
      $region48: #{tpu_custom_call.1} parent=5 // pred_fallthru
        _
    $region6: #{tpu_custom_call.1} parent=1 // loop_footer
      %s18 = sadd.s32 1, %s14
    $region7: #{tpu_custom_call.1} parent=1 // loop_footer_branch
      %13 = sbr.rel target = $region3
    $region8: #{tpu_custom_call.1} parent=1 // loop_exit
      _
    %749 = vsyncpa [#allocation3], 1
    %s750 = scalar_lea.sflag [#allocation3], 1
    %751 = vsyncpa %s750, 1

</llo_original>
